<compile_context>
chip_gen: v7x
topology: tpu7x:2x2x1
jax: 0.10.0
libtpu: 0.0.40
codegen_flags: <defaults>
</compile_context>

<pallas_src>
import functools
import math

import jax
import jax.numpy as jnp
from jax.experimental import pallas as pl
from jax.experimental.pallas import tpu as pltpu

_LANES = 128
_SUB_ROWS = 512           # inner-loop chunk: (512, 128) f32 temporaries = 256 KiB each
_MAX_TILE_ROWS = 4096     # 2 MiB per f32 input tile; 2 inputs x 2 buffers = 8 MiB
_SINGLE_BLOCK_ROWS = 256  # at/below this the kernel is launch-bound: one block, one pass


def _round_up(x, m):
    return ((x + m - 1) // m) * m


def _wing_loss_kernel(pred_ref, tgt_ref, out_ref, *,
                      width, inv_curvature, C, scale,
                      rows, tile_rows, sub_rows, needs_mask):
    blk = pl.program_id(0)
    n_sub = tile_rows // sub_rows  # static

    def chunk_loss(pred, tgt):
        pred = pred.astype(jnp.float32)
        tgt = tgt.astype(jnp.float32)
        d = jnp.abs(pred - tgt)
        small = width * jnp.log1p(d * inv_curvature)  # width * log(1 + |d|/curv) -> EUP
        large = d - C
        return jnp.where(d < width, small, large)

    def mask_rows(loss, row0):
        row_ids = jax.lax.broadcasted_iota(jnp.int32, loss.shape, 0)
        valid = (blk * tile_rows + row0 + row_ids) < rows
        return jnp.where(valid, loss, 0.0)

    def block_partial(masked):
        if n_sub == 1:
            loss = chunk_loss(pred_ref[...], tgt_ref[...])
            if masked:
                loss = mask_rows(loss, 0)
            acc = jnp.sum(loss, axis=0, keepdims=True)
        else:
            def body(s, acc):
                r0 = pl.multiple_of(s * sub_rows, sub_rows)
                loss = chunk_loss(pred_ref[pl.ds(r0, sub_rows), :],
                                  tgt_ref[pl.ds(r0, sub_rows), :])
                if masked:
                    loss = mask_rows(loss, r0)
                return acc + jnp.sum(loss, axis=0, keepdims=True)

            acc = jax.lax.fori_loop(0, n_sub, body,
                                    jnp.zeros((1, _LANES), jnp.float32),
                                    unroll=True)
        if scale != 1.0:
            acc = acc * scale
        return acc[None]  # (1, 1, LANES), lane-dense output block

    if not needs_mask:
        out_ref[...] = block_partial(masked=False)
    else:
        last = pl.num_programs(0) - 1

        @pl.when(blk != last)
        def _():
            out_ref[...] = block_partial(masked=False)

        @pl.when(blk == last)
        def _():
            out_ref[...] = block_partial(masked=True)


def _wing_tail_jnp(pred, tgt, width, inv_curvature, C):
    d = jnp.abs(pred.astype(jnp.float32) - tgt.astype(jnp.float32))
    return jnp.where(d < width, width * jnp.log1p(d * inv_curvature), d - C)


def wing_loss(prediction, target, width=5.0, curvature=0.5, method="mean"):
    if method not in ("mean", "sum"):
        raise ValueError("method must either be mean or sum")
    assert prediction.shape == target.shape

    width = float(width)
    curvature = float(curvature)
    inv_curvature = 1.0 / curvature
    C = width - width * math.log(1.0 + width / curvature)

    n_elems = prediction.size
    if n_elems == 0:
        # Match torch semantics: mean of empty -> nan, sum of empty -> 0.
        return jnp.float32(jnp.nan) if method == "mean" else jnp.float32(0.0)

    scale = (1.0 / n_elems) if method == "mean" else 1.0

    pred_flat = prediction.reshape(-1)
    tgt_flat = target.reshape(-1)

    # Ragged (<128-element) lane tail: plain jnp in the wrapper, so the kernel
    # never needs zero-padded full copies of both inputs.
    tail = n_elems % _LANES
    aligned = n_elems - tail
    tail_total = None
    if tail:
        tail_loss = _wing_tail_jnp(pred_flat[aligned:], tgt_flat[aligned:],
                                   width, inv_curvature, C)
        tail_total = jnp.sum(tail_loss) * scale

    if aligned == 0:
        return tail_total

    if tail:
        # TODO(synk): the prefix slice still costs one extra HBM pass for
        # misaligned sizes; true zero-copy would need a manual-DMA (pl.ANY) path.
        pred_flat = pred_flat[:aligned]
        tgt_flat = tgt_flat[:aligned]

    rows = aligned // _LANES
    pred_2d = pred_flat.reshape(rows, _LANES)
    tgt_2d = tgt_flat.reshape(rows, _LANES)

    # Tiling: big double-buffered tiles (HBM-streaming bound); >= 2 blocks once
    # rows > _SINGLE_BLOCK_ROWS so v7x's two TensorCores both get work; for
    # large tiles tile_rows is a multiple of the inner sub-chunk so per-op VMEM
    # temporaries stay bounded independent of tile size.
    if rows <= _SINGLE_BLOCK_ROWS:
        tile_rows = rows
        sub_rows = rows
    else:
        half = _round_up(pl.cdiv(rows, 2), 8)
        if half <= _SUB_ROWS:
            tile_rows = half
            sub_rows = half
        else:
            tile_rows = min(_MAX_TILE_ROWS, _round_up(half, _SUB_ROWS))
            sub_rows = _SUB_ROWS
    n_blocks = pl.cdiv(rows, tile_rows)
    needs_mask = (rows % tile_rows) != 0

    kernel = functools.partial(
        _wing_loss_kernel, width=width, inv_curvature=inv_curvature, C=C,
        scale=scale, rows=rows, tile_rows=tile_rows, sub_rows=sub_rows,
        needs_mask=needs_mask)

    in_bytes = (pred_2d.size * pred_2d.dtype.itemsize
                + tgt_2d.size * tgt_2d.dtype.itemsize)
    out_bytes = n_blocks * _LANES * 4
    cost = pl.CostEstimate(flops=10 * aligned, transcendentals=aligned,
                           bytes_accessed=in_bytes + out_bytes)

    partials = pl.pallas_call(
        kernel,
        out_shape=jax.ShapeDtypeStruct((n_blocks, 1, _LANES), jnp.float32),
        grid_spec=pltpu.PrefetchScalarGridSpec(
            num_scalar_prefetch=0,
            grid=(n_blocks,),
            in_specs=[
                pl.BlockSpec((tile_rows, _LANES), lambda i: (i, 0)),
                pl.BlockSpec((tile_rows, _LANES), lambda i: (i, 0)),
            ],
            out_specs=pl.BlockSpec((1, 1, _LANES), lambda i: (i, 0, 0)),
        ),
        compiler_params=pltpu.CompilerParams(
            dimension_semantics=("parallel",)),
        cost_estimate=cost,
    )(pred_2d, tgt_2d)

    # Partial sums already carry the 1/n scale for "mean", so only one small
    # reduction remains on the wrapper side.
    total = jnp.sum(partials)
    if tail_total is not None:
        total = total + tail_total
    return total


def _wing_loss_ref(prediction, target, width=5.0, curvature=0.5, method="mean"):
    C = width - width * jnp.log(1.0 + width / curvature)
    d = jnp.abs(prediction.astype(jnp.float32) - target.astype(jnp.float32))
    loss = jnp.where(d < width, width * jnp.log1p(d / curvature), d - C)
    return loss.mean() if method == "mean" else loss.sum()


if __name__ == "__main__":
    key = jax.random.PRNGKey(0)
    k1, k2, k3, k4, k5, k6, k7, k8 = jax.random.split(key, 8)

    # NCHW-style small shapes, consistent with a landmark-regression use case.
    pred = jax.random.normal(k1, (2, 4, 16, 16), dtype=jnp.float32) * 4.0
    tgt = jax.random.normal(k2, (2, 4, 16, 16), dtype=jnp.float32) * 4.0

    out_mean = jax.block_until_ready(wing_loss(pred, tgt, method="mean"))
    out_sum = jax.block_until_ready(wing_loss(pred, tgt, method="sum"))
    ref_mean = _wing_loss_ref(pred, tgt, method="mean")
    ref_sum = _wing_loss_ref(pred, tgt, method="sum")
    assert jnp.allclose(out_mean, ref_mean, rtol=1e-5, atol=1e-5), (out_mean, ref_mean)
    assert jnp.allclose(out_sum, ref_sum, rtol=1e-5, atol=1e-4), (out_sum, ref_sum)

    # Ragged (non-lane-aligned, <128 elems) shape exercises the pure-tail path.
    pred_r = jax.random.normal(k3, (3, 5, 7), dtype=jnp.float32) * 4.0
    tgt_r = jax.random.normal(k4, (3, 5, 7), dtype=jnp.float32) * 4.0
    out_r = jax.block_until_ready(wing_loss(pred_r, tgt_r, method="mean"))
    ref_r = _wing_loss_ref(pred_r, tgt_r, method="mean")
    assert jnp.allclose(out_r, ref_r, rtol=1e-5, atol=1e-5), (out_r, ref_r)

    # Multi-block path: exercises >=2 "parallel" blocks, inner fori_loop
    # sub-chunks and the pl.when-gated partial-last-block mask.
    pred_b = jax.random.normal(k5, (2, 4, 128, 136), dtype=jnp.float32) * 4.0
    tgt_b = jax.random.normal(k6, (2, 4, 128, 136), dtype=jnp.float32) * 4.0
    out_b = jax.block_until_ready(wing_loss(pred_b, tgt_b, method="mean"))
    ref_b = _wing_loss_ref(pred_b, tgt_b, method="mean")
    assert jnp.allclose(out_b, ref_b, rtol=1e-4, atol=1e-5), (out_b, ref_b)

    # Misaligned medium 1-D input: kernel over the aligned prefix + jnp tail.
    pred_m = jax.random.normal(k7, (70000,), dtype=jnp.float32) * 4.0
    tgt_m = jax.random.normal(k8, (70000,), dtype=jnp.float32) * 4.0
    out_m = jax.block_until_ready(wing_loss(pred_m, tgt_m, method="mean"))
    ref_m = _wing_loss_ref(pred_m, tgt_m, method="mean")
    assert jnp.allclose(out_m, ref_m, rtol=1e-4, atol=1e-5), (out_m, ref_m)

    print("KERNEL_OK")
</pallas_src>

<mosaic_0001>
module attributes {stable_mosaic.version = 11 : i64} {
  func.func @_wing_loss_kernel(%arg0: i32, %arg1: memref<16x128xf32, #tpu.memory_space<vmem>>, %arg2: memref<16x128xf32, #tpu.memory_space<vmem>>, %arg3: memref<1x1x128xf32, #tpu.memory_space<vmem>>) attributes {dimension_semantics = [#tpu.dimension_semantics<parallel>], iteration_bounds = array<i64: 1>, scalar_prefetch = 0 : i64, scratch_operands = 0 : i64, tpu.core_type = #tpu.core_type<tc>, window_params = [{transform_indices = @transform_0, window_bounds = array<i64: 16, 128>}, {transform_indices = @transform_1, window_bounds = array<i64: 16, 128>}, {transform_indices = @transform_2, window_bounds = array<i64: 1, 1, 128>}]} {
    %c0 = arith.constant 0 : index
    %c0_0 = arith.constant 0 : index
    %0 = vector.load %arg1[%c0, %c0_0] : memref<16x128xf32, #tpu.memory_space<vmem>>, vector<16x128xf32>
    %c0_1 = arith.constant 0 : index
    %c0_2 = arith.constant 0 : index
    %1 = vector.load %arg2[%c0_1, %c0_2] : memref<16x128xf32, #tpu.memory_space<vmem>>, vector<16x128xf32>
    %2 = arith.subf %0, %1 : vector<16x128xf32>
    %3 = math.absf %2 : vector<16x128xf32>
    %cst = arith.constant 2.000000e+00 : f32
    %4 = vector.broadcast %cst : f32 to vector<16x128xf32>
    %5 = arith.mulf %3, %4 : vector<16x128xf32>
    %6 = math.log1p %5 : vector<16x128xf32>
    %cst_3 = arith.constant 5.000000e+00 : f32
    %7 = vector.broadcast %cst_3 : f32 to vector<16x128xf32>
    %8 = arith.mulf %7, %6 : vector<16x128xf32>
    %cst_4 = arith.constant -6.9894762 : f32
    %9 = vector.broadcast %cst_4 : f32 to vector<16x128xf32>
    %10 = arith.subf %3, %9 : vector<16x128xf32>
    %cst_5 = arith.constant 5.000000e+00 : f32
    %11 = vector.broadcast %cst_5 : f32 to vector<16x128xf32>
    %12 = arith.cmpf olt, %3, %11 : vector<16x128xf32>
    %13 = arith.select %12, %8, %10 : vector<16x128xi1>, vector<16x128xf32>
    %cst_6 = arith.constant dense<0.000000e+00> : vector<128xf32>
    %14 = vector.multi_reduction <add>, %13, %cst_6 [0] : vector<16x128xf32> to vector<128xf32>
    %15 = vector.shape_cast %14 : vector<128xf32> to vector<1x128xf32>
    %cst_7 = arith.constant 4.8828125E-4 : f32
    %16 = vector.broadcast %cst_7 : f32 to vector<1x128xf32>
    %17 = arith.mulf %15, %16 : vector<1x128xf32>
    %18 = vector.shape_cast %17 : vector<1x128xf32> to vector<1x1x128xf32>
    %c0_8 = arith.constant 0 : index
    %c0_9 = arith.constant 0 : index
    %c0_10 = arith.constant 0 : index
    %19 = vector.load %arg3[%c0_8, %c0_9, %c0_10] : memref<1x1x128xf32, #tpu.memory_space<vmem>>, vector<1x1x128xf32>
    tpu.vector_store %arg3[%c0_8, %c0_9, %c0_10], %18 {strides = array<i32>} : memref<1x1x128xf32, #tpu.memory_space<vmem>>, vector<1x1x128xf32>,
    return
  }
  func.func @transform_0(%arg0: i32) -> (i32, i32) {
    %c0_i32 = arith.constant 0 : i32
    %c0_i32_0 = arith.constant 0 : i32
    return %arg0, %c0_i32 : i32, i32
  }
  func.func @transform_1(%arg0: i32) -> (i32, i32) {
    %c0_i32 = arith.constant 0 : i32
    %c0_i32_0 = arith.constant 0 : i32
    return %arg0, %c0_i32 : i32, i32
  }
  func.func @transform_2(%arg0: i32) -> (i32, i32, i32) {
    %c0_i32 = arith.constant 0 : i32
    %c0_i32_0 = arith.constant 0 : i32
    %c0_i32_1 = arith.constant 0 : i32
    return %arg0, %c0_i32, %c0_i32_0 : i32, i32, i32
  }
}

</mosaic_0001>

<llo_original>
// kernel: tpu_custom_call.1
$region0: #{tpu_custom_call.1}
  #allocation0 [shape = 'u32[]', space=smem, size = 0x4, offset = 0x4, fixed_abs, tag = 'smem constant byte address 0x4 - core index']
  #allocation1 [shape = 'u32[144,128]{1,0:T(1,128)}', space=vmem, size = 0x12000, scoped, tag = 'internal scratch']
  %s0 = inlined_call_operand.hbm [shape: f32[16,128], index: 0, kind: input, shape index: {}]
  %s1 = inlined_call_operand.hbm [shape: f32[16,128], index: 1, kind: input, shape index: {}]
  %s2 = inlined_call_operand.hbm [shape: f32[1,1,128], index: 2, kind: output, shape index: {}]
  %s3 = sld [smem:[#allocation0]]
  $region26: #{tpu_custom_call.1} parent=0
    _
  %s5 = ssub.s32 1, %s3
  %s6 = scalar_select 0, %s5, %s3
  $region1: #{tpu_custom_call.1} parent=0
    #allocation2 [shape = 'u8[8192]{0}', space=vmem, size = 0x2000, scoped, tag = 'input window, operand 0, single buffered']
    #allocation3 [shape = 's32[1]{0}', space=sflag, size = 0x4, scoped, tag = 'scoped memory for tpu_custom_call.1']
    #allocation4 [shape = 's32[1]{0}', space=sflag, size = 0x4, scoped, tag = 'scoped memory for tpu_custom_call.1']
    #allocation5 [shape = 'u8[8192]{0}', space=vmem, size = 0x2000, scoped, tag = 'input window, operand 1, single buffered']
    #allocation6 [shape = 's32[1]{0}', space=sflag, size = 0x4, scoped, tag = 'scoped memory for tpu_custom_call.1']
    #allocation7 [shape = 'u8[512]{0}', space=vmem, size = 0x400, scoped, tag = 'output window, operand 0, single buffered']
    %7 = vsyncpa [#allocation3], 0
    %8 = vsyncpa [#allocation6], 0
    %9 = vsyncpa [#allocation4], 0
    // Predicated region
    $region2: #{tpu_custom_call.1} parent=1 // pred_check
      _
    $region3: #{tpu_custom_call.1} parent=1 // pred_check_branch
      %11 = sbr.rel (0) target = $region5
    $region4: #{tpu_custom_call.1} parent=1 // pred_region
      %s13 = ssub.s32 256, 256
      %14 = vsyncadd [#allocation3], %s13
      %s15 = sshll.u32 [#allocation2], 4
      %s16 = int_to_ptr.vmem [resolvable:$true] %s15
      %21 = dma.hbm_to_vmem [thread:$0]  %s0, 256, %s16, [#allocation3], 128, 128, 8
    $region5: #{tpu_custom_call.1} parent=1 // pred_fallthru
      _
    // Predicated region
    $region6: #{tpu_custom_call.1} parent=1 // pred_check
      _
    $region7: #{tpu_custom_call.1} parent=1 // pred_check_branch
      %23 = sbr.rel (0) target = $region9
    $region8: #{tpu_custom_call.1} parent=1 // pred_region
      %s25 = ssub.s32 256, 256
      %26 = vsyncadd [#allocation6], %s25
      %s27 = sshll.u32 [#allocation5], 4
      %s28 = int_to_ptr.vmem [resolvable:$true] %s27
      %33 = dma.hbm_to_vmem [thread:$0]  %s1, 256, %s28, [#allocation6], 128, 128, 8
    $region9: #{tpu_custom_call.1} parent=1 // pred_fallthru
      _
    // Predicated region
    $region10: #{tpu_custom_call.1} parent=1 // pred_check
      _
    $region11: #{tpu_custom_call.1} parent=1 // pred_check_branch
      %35 = sbr.rel (0) target = $region13
    $region12: #{tpu_custom_call.1} parent=1 // pred_region
      %36 = dma.done [#allocation3], 256
    $region13: #{tpu_custom_call.1} parent=1 // pred_fallthru
      _
    // Predicated region
    $region14: #{tpu_custom_call.1} parent=1 // pred_check
      _
    $region15: #{tpu_custom_call.1} parent=1 // pred_check_branch
      %38 = sbr.rel (0) target = $region17
    $region16: #{tpu_custom_call.1} parent=1 // pred_region
      %39 = dma.done [#allocation6], 256
    $region17: #{tpu_custom_call.1} parent=1 // pred_fallthru
      _
    %v40 = vld [vmem:[#allocation2] sm:$0xff]
    %v41 = vld [vmem:[#allocation2 + $0x8] sm:$0xff]
    %v42 = vld [vmem:[#allocation5] sm:$0xff]
    %v43 = vld [vmem:[#allocation5 + $0x8] sm:$0xff]
    %v44 = vsub.f32 %v40, %v42
    %v45 = vsub.f32 %v41, %v43
    %v46 = vand.u32 2147483647, %v44
    %v47 = vand.u32 2147483647, %v45
    %v48 = vmul.f32 %v46, 2.0
    %v49 = vmul.f32 %v47, 2.0
    %v50 = vadd.f32 %v48, 1.0
    %v51 = vlog2.pop %v50
    %v52 = vmul.f32 %v51, 0.6931472
    %v53 = vmul.f32 -0.5, %v48
    %v54 = vadd.f32 %v53, 1.0
    %v55 = vmul.f32 %v54, %v48
    %v56 = vand.u32 2147483647, %v48
    %vm57 = vcmp.lt.f32.partialorder %v56, 0.0004427343
    %v58 = vsel %vm57, %v55, %v52
    %v59 = vadd.f32 %v49, 1.0
    %v60 = vlog2.pop %v59
    %v61 = vmul.f32 %v60, 0.6931472
    %v62 = vmul.f32 -0.5, %v49
    %v63 = vadd.f32 %v62, 1.0
    %v64 = vmul.f32 %v63, %v49
    %v65 = vand.u32 2147483647, %v49
    %vm66 = vcmp.lt.f32.partialorder %v65, 0.0004427343
    %v67 = vsel %vm66, %v64, %v61
    %v68 = vmul.f32 %v58, 5.0
    %v69 = vmul.f32 %v67, 5.0
    %v70 = vsub.f32 %v46, -6.989476
    %v71 = vsub.f32 %v47, -6.989476
    %vm72 = vcmp.lt.f32.partialorder %v46, 5.0
    %vm73 = vcmp.lt.f32.partialorder %v47, 5.0
    %v74 = vsel %vm72, %v68, %v70
    %v75 = vsel %vm73, %v69, %v71
    %v76 = vadd.f32 %v74, %v75
    %v77 = vrot.slane %v76, 4
    %v78 = vadd.f32 %v76, %v77
    %v79 = vrot.slane %v78, 2
    %v80 = vadd.f32 %v78, %v79
    %v81 = vrot.slane %v80, 1
    %v82 = vadd.f32 %v80, %v81
    %v83 = vmul.f32 %v82, 0.00048828125
    %84 = vst [vmem:[#allocation7] sm:$0x1] %v83
    // Predicated region
    $region18: #{tpu_custom_call.1} parent=1 // pred_check
      _
    $region19: #{tpu_custom_call.1} parent=1 // pred_check_branch
      %86 = sbr.rel (0) target = $region21
    $region20: #{tpu_custom_call.1} parent=1 // pred_region
      %s88 = ssub.s32 16, 16
      %89 = vsyncadd [#allocation4], %s88
      %s91 = sshll.u32 [#allocation7], 4
      %s92 = int_to_ptr.vmem [resolvable:$true] %s91
      %94 = dma.vmem_to_hbm [thread:$0]  %s92, 16, %s2, [#allocation4]
    $region21: #{tpu_custom_call.1} parent=1 // pred_fallthru
      _
    // Predicated region
    $region22: #{tpu_custom_call.1} parent=1 // pred_check
      _
    $region23: #{tpu_custom_call.1} parent=1 // pred_check_branch
      %96 = sbr.rel (0) target = $region25
    $region24: #{tpu_custom_call.1} parent=1 // pred_region
      %97 = dma.done [#allocation4], 16
    $region25: #{tpu_custom_call.1} parent=1 // pred_fallthru
      _
    %98 = vsyncpa [#allocation3], 1
    %99 = vsyncpa [#allocation6], 1
    %100 = vsyncpa [#allocation4], 1

</llo_original>
